<compile_context>
chip_gen: v5e
topology: v5e:2x2
jax: 0.10.0
libtpu: 0.0.40
codegen_flags: <defaults>
</compile_context>

<pallas_src>
import math
import jax
import jax.numpy as jnp
from jax import lax
from jax.experimental import pallas as pl
from jax.experimental.pallas import tpu as pltpu

LN_EPS = 1e-5  # F.layer_norm default eps; ModFC.eps (1e-6) is never used in forward()


def _round_up(x, m):
    return -(-x // m) * m


def _round_down(x, m):
    return (x // m) * m


def _device_budgets():
    """(vmem_limit_bytes, row_tile_target) sized per chip generation."""
    try:
        cap = int(pltpu.get_tpu_info().vmem_capacity_bytes)
    except Exception:
        cap = 64 * 1024 * 1024                      # conservative (v7x) fallback
    vmem_limit = int(min(100 * 1024 * 1024, (cap * 3) // 4))
    row_target = 512 if cap >= 96 * 1024 * 1024 else 256
    return vmem_limit, row_target


def _pick_tn(dout_p, din, vmem_budget):
    # Keep the whole (bf16, double-buffered) W resident when it is a small
    # fraction of the VMEM budget -> W is DMA'd from HBM exactly once.
    if 2 * (din * dout_p * 2) <= vmem_budget // 3:
        return dout_p
    for tn in (256, 512, 128):      # 256 matches the v6e/v7x MXU width; cheap on v5e
        if dout_p % tn == 0:
            return tn
    return dout_p


def _pick_tb(b, in_num, row_target, fits):
    """Largest batch-tile tb with sublane-aligned tm = tb*in_num that fits VMEM."""
    upper = max(1, min(b, -(-row_target // in_num)))
    for cand in range(upper, 0, -1):
        if (cand * in_num) % 8 == 0 and fits(cand * in_num):
            return cand
    # Smallest sublane-aligned tb (8 / gcd(in_num, 8) batch rows).
    for cand in range(1, 9):
        if cand <= b and (cand * in_num) % 8 == 0:
            return cand
    return b    # tm equals the full (un-padded) row extent -> no sublane constraint
    # TODO(synk): for very large Din add an inner "arbitrary" Din grid axis with an
    # f32 VMEM accumulator (pl.when init/finalize) instead of only shrinking tb.


# --------------------- scale = layer_norm(context @ W_scale^T) ---------------------
def _scale_ln_kernel(ctx_ref, ws_ref, o_ref):
    s = jnp.dot(ctx_ref[...], ws_ref[...], preferred_element_type=jnp.float32)
    mean = jnp.mean(s, axis=-1, keepdims=True)
    var = jnp.mean(jnp.square(s - mean), axis=-1, keepdims=True)
    o_ref[...] = ((s - mean) * lax.rsqrt(var + LN_EPS)).astype(o_ref.dtype)


def _compute_scale(ctx2d, ws_t_bf16):
    # ctx2d: (N, C)  ws_t_bf16: (C, Din) -> scale: (N, Din) bf16 (LN math in f32)
    # TODO(synk): tile this kernel if ctx_num x Din ever gets large; monolithic here.
    n, c = ctx2d.shape
    din = ws_t_bf16.shape[1]
    return pl.pallas_call(
        _scale_ln_kernel,
        out_shape=jax.ShapeDtypeStruct((n, din), jnp.bfloat16),
        grid_spec=pltpu.PrefetchScalarGridSpec(
            num_scalar_prefetch=0,
            grid=(1,),
            in_specs=[pl.BlockSpec((n, c), lambda i: (0, 0)),
                      pl.BlockSpec((c, din), lambda i: (0, 0))],
            out_specs=pl.BlockSpec((n, din), lambda i: (0, 0))),
        compiler_params=pltpu.CompilerParams(dimension_semantics=("arbitrary",)),
    )(ctx2d.astype(jnp.bfloat16), ws_t_bf16)


# --------------------------- modulated matmul kernels ------------------------------
def _mod_matmul_kernel(x_ref, s_ref, w_ref, b_ref, o_ref):
    # x: (TM, Din) bf16, s: (TM, Din) bf16, w: (Din, TN) bf16, b: (1, TN) f32
    acc = jnp.dot(x_ref[...] * s_ref[...], w_ref[...],
                  preferred_element_type=jnp.float32)
    o_ref[...] = (acc + b_ref[...]).astype(o_ref.dtype)


def _mod_matmul_bcast_kernel(x_ref, s_ref, w_ref, b_ref, o_ref):
    # x: (TR, Din) bf16, s: (1, 1, Din) bf16 (one ctx row), w: (Din, TN) bf16
    acc = jnp.dot(x_ref[...] * s_ref[0], w_ref[...],
                  preferred_element_type=jnp.float32)
    o_ref[...] = (acc + b_ref[...]).astype(o_ref.dtype)


# ----------------------------------- forward ---------------------------------------
def make_modfc_forward(native_weight, native_bias, scale_weight):
    """One-time weight prep hoisted out of the per-call forward (review item)."""
    dout, din = native_weight.shape
    dout_p = _round_up(dout, 128)            # lane-dense output tiles (unmasked stores)
    w_bf16 = jnp.zeros((din, dout_p), jnp.bfloat16).at[:, :dout].set(
        native_weight.T.astype(jnp.bfloat16))
    if native_bias is None:
        bias_p = jnp.zeros((1, dout_p), jnp.float32)
    else:
        bias_p = jnp.zeros((1, dout_p), jnp.float32).at[0, :dout].set(
            native_bias.astype(jnp.float32))
    ws_t_bf16 = scale_weight.T.astype(jnp.bfloat16)     # (C, Din)

    vmem_limit, row_target = _device_budgets()
    vmem_budget = int(vmem_limit * 0.7)

    def _cparams(sem):
        return pltpu.CompilerParams(dimension_semantics=sem,
                                    vmem_limit_bytes=vmem_limit)

    def forward(inp, context):
        b, in_num, din_ = inp.shape
        assert din_ == din
        ctx_num = context.shape[1]
        out_dtype = inp.dtype
        out_isz = jnp.dtype(out_dtype).itemsize

        tn = _pick_tn(dout_p, din, vmem_budget)
        nb_d = dout_p // tn

        scale = _compute_scale(context[0], ws_t_bf16)    # (ctx_num, Din) bf16

        if in_num == ctx_num:
            # ---- equal-length branch: flatten rows so the MXU sees TM = TB*N rows
            def fits(tm_):
                need = 2 * (tm_ * din * 2        # x block (bf16)
                            + tm_ * din * 2      # resident scale block (bf16)
                            + din * tn * 2       # W tile (bf16)
                            + tn * 4             # bias tile
                            + tm_ * tn * out_isz)
                return need <= vmem_budget

            tb = _pick_tb(b, in_num, row_target, fits)
            # Guarantee >=2 blocks along the parallel axes (v7x megacore).
            if (-(-b // tb)) * nb_d < 2 and tb > 1:
                for cand in range(min(tb - 1, -(-b // 2)), 0, -1):
                    if (cand * in_num) % 8 == 0:
                        tb = cand
                        break
            tm = tb * in_num
            bp = tb * (-(-b // tb))

            x2d = inp.reshape(b * in_num, din).astype(jnp.bfloat16)
            if bp > b:                           # small pad on bf16 data (fused under jit)
                x2d = jnp.pad(x2d, ((0, (bp - b) * in_num), (0, 0)))
            # One row-block worth of scale; constant index_map -> fetched once, reused.
            scale_blk = jnp.tile(scale, (tb, 1))                 # (tm, Din) bf16

            # Note: with nb_d > 1 the W stream repeats once per row block; the large
            # tm target keeps the number of row blocks small, and small W stays
            # fully resident (nb_d == 1) so it is fetched exactly once.
            out2d = pl.pallas_call(
                _mod_matmul_kernel,
                out_shape=jax.ShapeDtypeStruct((bp * in_num, dout_p), out_dtype),
                grid_spec=pltpu.PrefetchScalarGridSpec(
                    num_scalar_prefetch=0,
                    grid=(bp * in_num // tm, nb_d),
                    in_specs=[
                        pl.BlockSpec((tm, din), lambda i, j: (i, 0)),   # x rows (once)
                        pl.BlockSpec((tm, din), lambda i, j: (0, 0)),   # scale (resident)
                        pl.BlockSpec((din, tn), lambda i, j: (0, j)),   # W_native^T tile
                        pl.BlockSpec((1, tn), lambda i, j: (0, j)),     # bias tile
                    ],
                    out_specs=pl.BlockSpec((tm, tn), lambda i, j: (i, j))),
                compiler_params=_cparams(("parallel", "parallel")),
            )(x2d, scale_blk, w_bf16, bias_p)
            return out2d.reshape(bp, in_num, dout_p)[:b, :, :dout].astype(out_dtype)

        # ---- broadcast branch: out[b,i,j,:] = (x[b,i,:] * scale[j,:]) @ W^T + bias
        r = b * in_num
        tr = min(row_target, _round_up(r, 8))

        def fits_b(tr_):
            need = 2 * (tr_ * din * 2 + din * 2 + din * tn * 2 + tn * 4
                        + tr_ * tn * out_isz)
            return need <= vmem_budget

        while tr > 8 and not fits_b(tr):
            tr = max(8, _round_down(tr // 2, 8))
        rp = _round_up(r, tr)
        if (rp // tr) * ctx_num * nb_d < 2 and tr > 8:   # v7x megacore: >=2 blocks
            tr = max(8, _round_down(tr // 2, 8))
            rp = _round_up(r, tr)

        x2d = inp.reshape(r, din).astype(jnp.bfloat16)
        if rp > r:
            x2d = jnp.pad(x2d, ((0, rp - r), (0, 0)))
        scale3 = scale.reshape(ctx_num, 1, din)          # (ctx, 1, Din) bf16

        # Grid (dout-tile, row-tile, ctx): W tile index only changes on the outermost
        # axis -> streamed exactly once (or resident when nb_d == 1); x is streamed
        # nb_d times; the per-ctx scale row is tiny.  The output is a 2D lane-dense
        # (rows, ctx*dout_p) slab -> no post-kernel transpose, only a reshape/slice.
        out2d = pl.pallas_call(
            _mod_matmul_bcast_kernel,
            out_shape=jax.ShapeDtypeStruct((rp, ctx_num * dout_p), out_dtype),
            grid_spec=pltpu.PrefetchScalarGridSpec(
                num_scalar_prefetch=0,
                grid=(nb_d, rp // tr, ctx_num),
                in_specs=[
                    pl.BlockSpec((tr, din), lambda jd, rr, j: (rr, 0)),      # x rows
                    pl.BlockSpec((1, 1, din), lambda jd, rr, j: (j, 0, 0)),  # scale row j
                    pl.BlockSpec((din, tn), lambda jd, rr, j: (0, jd)),      # W tile
                    pl.BlockSpec((1, tn), lambda jd, rr, j: (0, jd)),        # bias tile
                ],
                out_specs=pl.BlockSpec(
                    (tr, tn), lambda jd, rr, j: (rr, j * nb_d + jd))),
            compiler_params=_cparams(("parallel", "parallel", "parallel")),
        )(x2d, scale3, w_bf16, bias_p)
        out = out2d.reshape(rp, ctx_num, dout_p)[:r, :, :dout]
        return out.reshape(b, in_num, ctx_num, dout).astype(out_dtype)
        # TODO(synk): self.activation is None by default; a non-None activation would
        # be applied to the accumulator inside the kernels before the store.

    return forward


def modfc_forward(inp, context, native_weight, native_bias, scale_weight):
    """Convenience wrapper (weight prep NOT hoisted; prefer make_modfc_forward)."""
    return make_modfc_forward(native_weight, native_bias, scale_weight)(inp, context)


# ----------------------------------- reference -------------------------------------
def modfc_ref(inp, context, native_weight, native_bias, scale_weight):
    """Pure-JAX (f32) reference mirroring the PyTorch forward."""
    if inp.shape[1] != context.shape[1]:
        inp = inp[:, :, None, :]
        context = context[:, None, :, :]
    s = context @ scale_weight.T
    mean = jnp.mean(s, axis=-1, keepdims=True)
    var = jnp.mean(jnp.square(s - mean), axis=-1, keepdims=True)
    scale = (s - mean) / jnp.sqrt(var + LN_EPS)
    return (inp * scale) @ native_weight.T + native_bias


if __name__ == "__main__":
    B, IN_NUM, IN_F, OUT_F, CTX_F = 2, 8, 32, 48, 16

    key = jax.random.PRNGKey(0)
    k_w, k_s, k_x, k_c1, k_c2 = jax.random.split(key, 5)

    # kaiming_uniform_(a=sqrt(5)) -> U(-1/sqrt(fan_in), 1/sqrt(fan_in))
    wb = 1.0 / math.sqrt(IN_F)
    native_weight = jax.random.uniform(k_w, (OUT_F, IN_F), jnp.float32, -wb, wb)
    native_bias = jnp.zeros((OUT_F,), jnp.float32)
    sb = 1.0 / math.sqrt(CTX_F)
    scale_weight = jax.random.uniform(k_s, (IN_F, CTX_F), jnp.float32, -sb, sb)

    x = jax.random.normal(k_x, (B, IN_NUM, IN_F), jnp.float32)

    fwd = jax.jit(make_modfc_forward(native_weight, native_bias, scale_weight))

    # Tolerances sized for bf16 streaming / bf16 MXU operands (f32 accumulation)
    # vs. an f32 reference.
    ATOL = RTOL = 5e-2

    # --- branch 1: context length == input length ---
    ctx_eq = jax.random.normal(k_c1, (1, IN_NUM, CTX_F), jnp.float32)
    out_eq = jax.block_until_ready(fwd(x, ctx_eq))
    ref_eq = modfc_ref(x, ctx_eq, native_weight, native_bias, scale_weight)
    assert out_eq.shape == (B, IN_NUM, OUT_F)
    assert jnp.allclose(out_eq, ref_eq, atol=ATOL, rtol=RTOL)

    # --- branch 2: context length != input length (unsqueeze / broadcast path) ---
    CTX_NUM = 6
    ctx_ne = jax.random.normal(k_c2, (1, CTX_NUM, CTX_F), jnp.float32)
    out_ne = jax.block_until_ready(fwd(x, ctx_ne))
    ref_ne = modfc_ref(x, ctx_ne, native_weight, native_bias, scale_weight)
    assert out_ne.shape == (B, IN_NUM, CTX_NUM, OUT_F)
    assert jnp.allclose(out_ne, ref_ne, atol=ATOL, rtol=RTOL)

    print("KERNEL_OK")
</pallas_src>

<mosaic_0001>
module attributes {stable_mosaic.version = 11 : i64} {
  func.func @_scale_ln_kernel(%arg0: i32, %arg1: memref<8x16xbf16, #tpu.memory_space<vmem>>, %arg2: memref<16x32xbf16, #tpu.memory_space<vmem>>, %arg3: memref<8x32xbf16, #tpu.memory_space<vmem>>) attributes {dimension_semantics = [#tpu.dimension_semantics<arbitrary>], iteration_bounds = array<i64: 1>, scalar_prefetch = 0 : i64, scratch_operands = 0 : i64, tpu.core_type = #tpu.core_type<tc>, window_params = [{pipeline_mode = #tpu.pipeline_mode<synchronous>, transform_indices = @transform_0, window_bounds = array<i64: 8, 16>}, {pipeline_mode = #tpu.pipeline_mode<synchronous>, transform_indices = @transform_1, window_bounds = array<i64: 16, 32>}, {pipeline_mode = #tpu.pipeline_mode<synchronous>, transform_indices = @transform_2, window_bounds = array<i64: 8, 32>}]} {
    %c0 = arith.constant 0 : index
    %c0_0 = arith.constant 0 : index
    %0 = vector.load %arg1[%c0, %c0_0] : memref<8x16xbf16, #tpu.memory_space<vmem>>, vector<8x16xbf16>
    %c0_1 = arith.constant 0 : index
    %c0_2 = arith.constant 0 : index
    %1 = vector.load %arg2[%c0_1, %c0_2] : memref<16x32xbf16, #tpu.memory_space<vmem>>, vector<16x32xbf16>
    %cst = arith.constant dense<0.000000e+00> : vector<8x32xf32>
    %2 = tpu.matmul %0, %1, %cst {dimension_numbers = #tpu.dot_dimension_numbers<[1], [0], [0], [1], [0, 0, 1, 1], [], []>} : vector<8x16xbf16>, vector<16x32xbf16>, vector<8x32xf32> -> vector<8x32xf32>
    %cst_3 = arith.constant dense<0.000000e+00> : vector<8xf32>
    %3 = vector.multi_reduction <add>, %2, %cst_3 [1] : vector<8x32xf32> to vector<8xf32>
    %4 = vector.shape_cast %3 : vector<8xf32> to vector<8x1xf32>
    %cst_4 = arith.constant 3.200000e+01 : f32
    %5 = vector.broadcast %cst_4 : f32 to vector<8x1xf32>
    %6 = arith.divf %4, %5 : vector<8x1xf32>
    %7 = vector.broadcast %6 : vector<8x1xf32> to vector<8x32xf32>
    %8 = arith.subf %2, %7 : vector<8x32xf32>
    %9 = arith.mulf %8, %8 : vector<8x32xf32>
    %cst_5 = arith.constant dense<0.000000e+00> : vector<8xf32>
    %10 = vector.multi_reduction <add>, %9, %cst_5 [1] : vector<8x32xf32> to vector<8xf32>
    %11 = vector.shape_cast %10 : vector<8xf32> to vector<8x1xf32>
    %cst_6 = arith.constant 3.200000e+01 : f32
    %12 = vector.broadcast %cst_6 : f32 to vector<8x1xf32>
    %13 = arith.divf %11, %12 : vector<8x1xf32>
    %14 = vector.broadcast %6 : vector<8x1xf32> to vector<8x32xf32>
    %15 = arith.subf %2, %14 : vector<8x32xf32>
    %cst_7 = arith.constant 9.99999974E-6 : f32
    %16 = vector.broadcast %cst_7 : f32 to vector<8x1xf32>
    %17 = arith.addf %13, %16 : vector<8x1xf32>
    %18 = math.rsqrt %17 : vector<8x1xf32>
    %19 = vector.broadcast %18 : vector<8x1xf32> to vector<8x32xf32>
    %20 = arith.mulf %15, %19 : vector<8x32xf32>
    %21 = arith.truncf %20 : vector<8x32xf32> to vector<8x32xbf16>
    %c0_8 = arith.constant 0 : index
    %c0_9 = arith.constant 0 : index
    %22 = vector.load %arg3[%c0_8, %c0_9] : memref<8x32xbf16, #tpu.memory_space<vmem>>, vector<8x32xbf16>
    tpu.vector_store %arg3[%c0_8, %c0_9], %21 {strides = array<i32>} : memref<8x32xbf16, #tpu.memory_space<vmem>>, vector<8x32xbf16>,
    return
  }
  func.func @transform_0(%arg0: i32) -> (i32, i32) {
    %c0_i32 = arith.constant 0 : i32
    %c0_i32_0 = arith.constant 0 : i32
    %c0_i32_1 = arith.constant 0 : i32
    return %c0_i32, %c0_i32_0 : i32, i32
  }
  func.func @transform_1(%arg0: i32) -> (i32, i32) {
    %c0_i32 = arith.constant 0 : i32
    %c0_i32_0 = arith.constant 0 : i32
    %c0_i32_1 = arith.constant 0 : i32
    return %c0_i32, %c0_i32_0 : i32, i32
  }
  func.func @transform_2(%arg0: i32) -> (i32, i32) {
    %c0_i32 = arith.constant 0 : i32
    %c0_i32_0 = arith.constant 0 : i32
    %c0_i32_1 = arith.constant 0 : i32
    return %c0_i32, %c0_i32_0 : i32, i32
  }
}

module attributes {stable_mosaic.version = 11 : i64} {
  func.func @_mod_matmul_kernel(%arg0: i32, %arg1: i32, %arg2: memref<8x32xbf16, #tpu.memory_space<vmem>>, %arg3: memref<8x32xbf16, #tpu.memory_space<vmem>>, %arg4: memref<32x128xbf16, #tpu.memory_space<vmem>>, %arg5: memref<1x128xf32, #tpu.memory_space<vmem>>, %arg6: memref<8x128xf32, #tpu.memory_space<vmem>>) attributes {dimension_semantics = [#tpu.dimension_semantics<parallel>, #tpu.dimension_semantics<parallel>], iteration_bounds = array<i64: 2, 1>, scalar_prefetch = 0 : i64, scratch_operands = 0 : i64, tpu.core_type = #tpu.core_type<tc>, window_params = [{transform_indices = @transform_0, window_bounds = array<i64: 8, 32>}, {pipeline_mode = #tpu.pipeline_mode<synchronous>, transform_indices = @transform_1, window_bounds = array<i64: 8, 32>}, {transform_indices = @transform_2, window_bounds = array<i64: 32, 128>}, {transform_indices = @transform_3, window_bounds = array<i64: 1, 128>}, {transform_indices = @transform_4, window_bounds = array<i64: 8, 128>}]} {
    %c0 = arith.constant 0 : index
    %c0_0 = arith.constant 0 : index
    %0 = vector.load %arg2[%c0, %c0_0] : memref<8x32xbf16, #tpu.memory_space<vmem>>, vector<8x32xbf16>
    %c0_1 = arith.constant 0 : index
    %c0_2 = arith.constant 0 : index
    %1 = vector.load %arg3[%c0_1, %c0_2] : memref<8x32xbf16, #tpu.memory_space<vmem>>, vector<8x32xbf16>
    %2 = arith.mulf %0, %1 : vector<8x32xbf16>
    %c0_3 = arith.constant 0 : index
    %c0_4 = arith.constant 0 : index
    %3 = vector.load %arg4[%c0_3, %c0_4] : memref<32x128xbf16, #tpu.memory_space<vmem>>, vector<32x128xbf16>
    %cst = arith.constant dense<0.000000e+00> : vector<8x128xf32>
    %4 = tpu.matmul %2, %3, %cst {dimension_numbers = #tpu.dot_dimension_numbers<[1], [0], [0], [1], [0, 0, 1, 1], [], []>} : vector<8x32xbf16>, vector<32x128xbf16>, vector<8x128xf32> -> vector<8x128xf32>
    %c0_5 = arith.constant 0 : index
    %c0_6 = arith.constant 0 : index
    %5 = vector.load %arg5[%c0_5, %c0_6] : memref<1x128xf32, #tpu.memory_space<vmem>>, vector<1x128xf32>
    %6 = vector.broadcast %5 : vector<1x128xf32> to vector<8x128xf32>
    %7 = arith.addf %4, %6 : vector<8x128xf32>
    %c0_7 = arith.constant 0 : index
    %c0_8 = arith.constant 0 : index
    %8 = vector.load %arg6[%c0_7, %c0_8] : memref<8x128xf32, #tpu.memory_space<vmem>>, vector<8x128xf32>
    tpu.vector_store %arg6[%c0_7, %c0_8], %7 {strides = array<i32>} : memref<8x128xf32, #tpu.memory_space<vmem>>, vector<8x128xf32>,
    return
  }
  func.func @transform_0(%arg0: i32, %arg1: i32) -> (i32, i32) {
    %c0_i32 = arith.constant 0 : i32
    %c0_i32_0 = arith.constant 0 : i32
    return %arg0, %c0_i32 : i32, i32
  }
  func.func @transform_1(%arg0: i32, %arg1: i32) -> (i32, i32) {
    %c0_i32 = arith.constant 0 : i32
    %c0_i32_0 = arith.constant 0 : i32
    %c0_i32_1 = arith.constant 0 : i32
    return %c0_i32, %c0_i32_0 : i32, i32
  }
  func.func @transform_2(%arg0: i32, %arg1: i32) -> (i32, i32) {
    %c0_i32 = arith.constant 0 : i32
    %c0_i32_0 = arith.constant 0 : i32
    return %c0_i32, %arg1 : i32, i32
  }
  func.func @transform_3(%arg0: i32, %arg1: i32) -> (i32, i32) {
    %c0_i32 = arith.constant 0 : i32
    %c0_i32_0 = arith.constant 0 : i32
    return %c0_i32, %arg1 : i32, i32
  }
  func.func @transform_4(%arg0: i32, %arg1: i32) -> (i32, i32) {
    %c0_i32 = arith.constant 0 : i32
    return %arg0, %arg1 : i32, i32
  }
}

</mosaic_0001>

<llo_original>
// kernel: forward.3
$region0: #{forward.3}
  #allocation0 [shape = 'u32[]', space=smem, size = 0x4, offset = 0x4, fixed_abs, tag = 'smem constant byte address 0x4 - core index']
  #allocation1 [shape = 'u32[72,128]{1,0:T(1,128)}', space=vmem, size = 0x9000, scoped, tag = 'internal scratch']
  %s0 = inlined_call_operand.vmem [shape: bf16[16,32], index: 0, kind: input, shape index: {}]
  %s1 = inlined_call_operand.vmem [shape: bf16[8,32], index: 1, kind: input, shape index: {}]
  %s2 = inlined_call_operand.vmem [shape: bf16[32,128], index: 2, kind: input, shape index: {}]
  %s3 = inlined_call_operand.vmem [shape: f32[1,128], index: 3, kind: input, shape index: {}]
  %s4 = inlined_call_operand.hbm [shape: f32[16,128], index: 4, kind: output, shape index: {}]
  %s5 = sld [smem:[#allocation0]]
  $region49: #{forward.3} parent=0
    _
  %s7 = ssub.s32 1, %s5
  %s8 = scalar_select 0, %s7, %s5
  $region1: #{forward.3} parent=0
    #allocation2 [shape = 'u8[8192]{0}', space=vmem, size = 0x2000, scoped, tag = 'output window, operand 0']
    #allocation3 [shape = 's32[2]{0}', space=sflag, size = 0x8, scoped, tag = 'scoped memory for forward.3']
    %9 = vsyncpa [#allocation3], 0
    %s10 = scalar_lea.sflag [#allocation3], 1
    %11 = vsyncpa %s10, 0
    loop: start=0, step=1, limit=4
    $region2: #{forward.3} parent=1 // loop_pre_header
      _
    $region3: #{forward.3} parent=1 // loop_header
      %s13 = sphi 0, %s17
      %p14 = scmp.ge.s32.totalorder %s13, 4
      %s20 = sphi 0, %s32
      %s21 = sphi 0, %s28
      %s22 = sphi 0, %s20
      %s23 = sphi 0, %s21
      %s24 = sphi 0, %s22
      %s25 = sphi 0, %s23
      %s35 = sphi 0, %s37
      %s38 = sphi 0, %s35
      %s39 = sphi 0, %s38
      %s55 = sphi 0, %s39
      %s59 = sphi 0, %s59
      %s61 = sphi 0, %s59
      %s62 = sphi 0, %s61
      %s76 = sphi 0, %s62
      %s82 = sphi 0, %s84
      %s85 = sphi 0, %s82
      %s86 = sphi 0, %s85
      %s102 = sphi 0, %s86
      %s108 = sphi 0, %s110
      %s111 = sphi 0, %s108
      %s112 = sphi 0, %s111
      %s128 = sphi 0, %s112
      %s136 = sphi 0, %s138
      %s139 = sphi 0, %s136
      %s140 = sphi 0, %s139
      %s156 = sphi 0, %s140
    $region4: #{forward.3} parent=1 // loop_header_branch
      %16 = sbr.rel (%p14) target = $region8
    $region5: #{forward.3} parent=1 // loop_body
      %s18 = ssub.s32 %s13, 1
      %s19 = ssub.s32 %s13, 2
      %s26 = sadd.s32 1, %s21
      %p27 = scmp.ge.s32.totalorder %s26, 1
      %s28 = scalar_select %p27, 0, %s26
      %s29 = sadd.s32 1, %s20
      %s30 = scalar_select %p27, %s29, %s20
      %p31 = scmp.ge.s32.totalorder %s30, 2
      %s32 = scalar_select %p31, 0, %s30
      %s33 = ssub.s32 %s20, %s32
      %p34 = scmp.eq.s32.totalorder %s33, 0
      %s36 = sadd.s32 %s35, 1
      %s37 = scalar_select %p34, %s35, %s36
      %p40 = pneg %p34
      %p41 = scmp.eq.s32.totalorder %s13, 1
      %p42 = por %p40, %p41
      %p43 = scmp.ne.s32.totalorder %s35, %s38
      %p44 = scmp.eq.s32.totalorder %s13, 0
      %p45 = por %p43, %p44
      %p46 = scmp.ne.s32.totalorder %s35, %s38
      %p47 = scmp.eq.s32.totalorder %s18, 1
      %p48 = por %p46, %p47
      %p49 = scmp.ne.s32.totalorder %s38, %s39
      %p50 = scmp.eq.s32.totalorder %s18, 0
      %p51 = por %p49, %p50
      %p52 = scmp.ne.s32.totalorder %s38, %s39
      %p53 = scmp.eq.s32.totalorder %s19, 1
      %p54 = por %p52, %p53
      %p56 = scmp.ne.s32.totalorder %s39, %s55
      %p57 = scmp.eq.s32.totalorder %s19, 0
      %p58 = por %p56, %p57
      %s60 = sadd.s32 %s59, 1
      %p63 = scmp.eq.s32.totalorder %s13, 1
      %p64 = scmp.ne.s32.totalorder %s59, %s61
      %p65 = scmp.eq.s32.totalorder %s13, 0
      %p66 = por %p64, %p65
      %p67 = scmp.ne.s32.totalorder %s59, %s61
      %p68 = scmp.eq.s32.totalorder %s18, 1
      %p69 = por %p67, %p68
      %p70 = scmp.ne.s32.totalorder %s61, %s62
      %p71 = scmp.eq.s32.totalorder %s18, 0
      %p72 = por %p70, %p71
      %p73 = scmp.ne.s32.totalorder %s61, %s62
      %p74 = scmp.eq.s32.totalorder %s19, 1
      %p75 = por %p73, %p74
      %p77 = scmp.ne.s32.totalorder %s62, %s76
      %p78 = scmp.eq.s32.totalorder %s19, 0
      %p79 = por %p77, %p78
      %s80 = ssub.s32 %s21, %s28
      %p81 = scmp.eq.s32.totalorder %s80, 0
      %s83 = sadd.s32 %s82, 1
      %s84 = scalar_select %p81, %s82, %s83
      %p87 = pneg %p81
      %p88 = scmp.eq.s32.totalorder %s13, 1
      %p89 = por %p87, %p88
      %p90 = scmp.ne.s32.totalorder %s82, %s85
      %p91 = scmp.eq.s32.totalorder %s13, 0
      %p92 = por %p90, %p91
      %p93 = scmp.ne.s32.totalorder %s82, %s85
      %p94 = scmp.eq.s32.totalorder %s18, 1
      %p95 = por %p93, %p94
      %p96 = scmp.ne.s32.totalorder %s85, %s86
      %p97 = scmp.eq.s32.totalorder %s18, 0
      %p98 = por %p96, %p97
      %p99 = scmp.ne.s32.totalorder %s85, %s86
      %p100 = scmp.eq.s32.totalorder %s19, 1
      %p101 = por %p99, %p100
      %p103 = scmp.ne.s32.totalorder %s86, %s102
      %p104 = scmp.eq.s32.totalorder %s19, 0
      %p105 = por %p103, %p104
      %s106 = ssub.s32 %s21, %s28
      %p107 = scmp.eq.s32.totalorder %s106, 0
      %s109 = sadd.s32 %s108, 1
      %s110 = scalar_select %p107, %s108, %s109
      %p113 = pneg %p107
      %p114 = scmp.eq.s32.totalorder %s13, 1
      %p115 = por %p113, %p114
      %p116 = scmp.ne.s32.totalorder %s108, %s111
      %p117 = scmp.eq.s32.totalorder %s13, 0
      %p118 = por %p116, %p117
      %p119 = scmp.ne.s32.totalorder %s108, %s111
      %p120 = scmp.eq.s32.totalorder %s18, 1
      %p121 = por %p119, %p120
      %p122 = scmp.ne.s32.totalorder %s111, %s112
      %p123 = scmp.eq.s32.totalorder %s18, 0
      %p124 = por %p122, %p123
      %p125 = scmp.ne.s32.totalorder %s111, %s112
      %p126 = scmp.eq.s32.totalorder %s19, 1
      %p127 = por %p125, %p126
      %p129 = scmp.ne.s32.totalorder %s112, %s128
      %p130 = scmp.eq.s32.totalorder %s19, 0
      %p131 = por %p129, %p130
      %s132 = ssub.s32 %s20, %s32
      %s133 = ssub.s32 %s21, %s28
      %s134 = sor.u32 %s132, %s133
      %p135 = scmp.eq.s32.totalorder %s134, 0
      %s137 = sadd.s32 %s136, 1
      %s138 = scalar_select %p135, %s136, %s137
      %p141 = pneg %p135
      %p142 = scmp.eq.s32.totalorder %s13, 1
      %p143 = por %p141, %p142
      %p144 = scmp.ne.s32.totalorder %s136, %s139
      %p145 = scmp.eq.s32.totalorder %s13, 0
      %p146 = por %p144, %p145
      %p147 = scmp.ne.s32.totalorder %s136, %s139
      %p148 = scmp.eq.s32.totalorder %s18, 1
      %p149 = por %p147, %p148
      %p150 = scmp.ne.s32.totalorder %s139, %s140
      %p151 = scmp.eq.s32.totalorder %s18, 0
      %p152 = por %p150, %p151
      %p153 = scmp.ne.s32.totalorder %s139, %s140
      %p154 = scmp.eq.s32.totalorder %s19, 1
      %p155 = por %p153, %p154
      %p157 = scmp.ne.s32.totalorder %s140, %s156
      %p158 = scmp.eq.s32.totalorder %s19, 0
      %p159 = por %p157, %p158
      %p160 = scmp.le.s32.totalorder 1, %s13
      %p161 = scmp.lt.s32.totalorder %s13, 3
      %p162 = pnand %p160, %p161
      %p163 = pneg %p162
      // Predicated region
      $region9: #{forward.3} parent=5 // pred_check
        _
      $region10: #{forward.3} parent=5 // pred_check_branch
        %165 = sbr.rel (%p162) target = $region12
      $region11: #{forward.3} parent=5 // pred_region
        %s166 = ssub.s32 %s13, 1
        // Predicated region
        $region13: #{forward.3} parent=11 // pred_check
          %p167 = pneg %p72
        $region14: #{forward.3} parent=11 // pred_check_branch
          %169 = sbr.rel (%p167) target = $region16
        $region15: #{forward.3} parent=11 // pred_region
          _
        $region16: #{forward.3} parent=11 // pred_fallthru
          _
        // Predicated region
        $region17: #{forward.3} parent=11 // pred_check
          %p170 = pneg %p98
        $region18: #{forward.3} parent=11 // pred_check_branch
          %172 = sbr.rel (%p170) target = $region20
        $region19: #{forward.3} parent=11 // pred_region
          %p173 = scmp.lt.s32.totalorder %s23, 0
          %s174 = scalar_select %p173, %s23, 0
          %s175 = smul.addr %s174, 4
          %s176 = scalar_lea.vmem %s2, %s175
        $region20: #{forward.3} parent=11 // pred_fallthru
          _
        // Predicated region
        $region21: #{forward.3} parent=11 // pred_check
          %p177 = pneg %p124
        $region22: #{forward.3} parent=11 // pred_check_branch
          %179 = sbr.rel (%p177) target = $region24
        $region23: #{forward.3} parent=11 // pred_region
          %p180 = scmp.lt.s32.totalorder %s23, 0
          %s181 = scalar_select %p180, %s23, 0
          %s182 = scalar_lea.vmem %s3, %s181
        $region24: #{forward.3} parent=11 // pred_fallthru
          _
      $region12: #{forward.3} parent=5 // pred_fallthru
        _
      %p183 = scmp.lt.s32.totalorder %s13, 2
      // Predicated region
      $region25: #{forward.3} parent=5 // pred_check
        %p184 = pneg %p183
      $region26: #{forward.3} parent=5 // pred_check_branch
        %186 = sbr.rel (%p184) target = $region28
      $region27: #{forward.3} parent=5 // pred_region
        // Predicated region
        $region29: #{forward.3} parent=27 // pred_check
          %p187 = pneg %p45
        $region30: #{forward.3} parent=27 // pred_check_branch
          %189 = sbr.rel (%p187) target = $region32
        $region31: #{forward.3} parent=27 // pred_region
          %p190 = scmp.lt.s32.totalorder %s20, 1
          %s191 = scalar_select %p190, %s20, 1
          %s192 = smul.addr %s191, 4
          %s193 = scalar_lea.vmem %s0, %s192
        $region32: #{forward.3} parent=27 // pred_fallthru
          _
      $region28: #{forward.3} parent=5 // pred_fallthru
        _
      %p194 = scmp.le.s32.totalorder 1, %s13
      %p195 = scmp.lt.s32.totalorder %s13, 3
      %p196 = pnand %p194, %p195
      %p197 = pneg %p196
      // Predicated region
      $region33: #{forward.3} parent=5 // pred_check
        _
      $region34: #{forward.3} parent=5 // pred_check_branch
        %199 = sbr.rel (%p196) target = $region36
      $region35: #{forward.3} parent=5 // pred_region
        %s200 = ssub.s32 %s13, 1
        %p201 = scmp.lt.s32.totalorder %s22, 1
        %s202 = scalar_select %p201, %s22, 1
        %s203 = smul.addr %s202, 4
        %s204 = scalar_lea.vmem %s0, %s203
        %p205 = pneg %p51
        %p206 = pneg %p48
        %p207 = pneg %p72
        %p208 = pneg %p69
        %p209 = scmp.lt.s32.totalorder %s23, 0
        %s210 = scalar_select %p209, %s23, 0
        %s211 = smul.addr %s210, 4
        %s212 = scalar_lea.vmem %s2, %s211
        %p213 = pneg %p98
        %p214 = pneg %p95
        %p215 = scmp.lt.s32.totalorder %s23, 0
        %s216 = scalar_select %p215, %s23, 0
        %s217 = scalar_lea.vmem %s3, %s216
        %p218 = pneg %p124
        %p219 = pneg %p121
        %p220 = pneg %p152
        %p221 = pneg %p149
        %s222 = sand.u32 %s139, 1
        %s223 = scalar_lea.sflag [#allocation3], %s222
        %s224 = sand.u32 %s139, 1
        %s225 = smul.addr %s224, 8
        %s226 = scalar_lea.vmem [#allocation2], %s225
        %p227 = scmp.lt.s32.totalorder %s22, 1
        %s228 = scalar_select %p227, %s22, 1
        %s229 = smul.addr %s228, 4
        %s230 = scalar_lea.vmem %s0, %s229
        %p231 = scmp.lt.s32.totalorder %s23, 0
        %s232 = scalar_select %p231, %s23, 0
        %s233 = smul.addr %s232, 4
        %s234 = scalar_lea.vmem %s2, %s233
        %p235 = scmp.lt.s32.totalorder %s23, 0
        %s236 = scalar_select %p235, %s23, 0
        %s237 = scalar_lea.vmem %s3, %s236
        %v239 = vld [vmem:[%s230] sm:$0xf]
        %v240 = vld [vmem:[%s1] sm:$0xf]
        %v241 = vunpack.c.l.bf16 %v239
        %v242 = vunpack.c.l.bf16 %v240
        %v243 = vmul.f32 %v241, %v242
        %v244 = vpack.c.bf16 %v243, %v243
        %v245 = vld [vmem:[%s234] sm:$0xf]
        %v246 = vld [vmem:[%s234 + $0x4] sm:$0xf]
        %v247 = vld [vmem:[%s234 + $0x8] sm:$0xf]
        %v248 = vld [vmem:[%s234 + $0xc] sm:$0xf]
        %v249 = vld [vmem:[%s237] sm:$0x1]
        %v251 = vperm.slane %v249, 0
        %v257 = vunpack.c.l.b16 %v245
        %v258 = vunpack.c.l.b16 %v246
        %v259 = vunpack.c.l.b16 %v247
        %v260 = vunpack.c.l.b16 %v248
        %v261 = vpack.c.b16 %v258, %v257
        %v262 = vpack.c.b16 %v260, %v259
        %vm265 = vcmask 261120
        %v267 = vsel %vm265, %v244, 0
        %269 = vmatpush.bf16.msra.mxu0 0
        %270 = vmatpush.bf16.msra.mxu0 0
        %271 = vmatpush.bf16.msra.mxu0 0
        %272 = vmatpush.bf16.msra.mxu0 0
        %273 = vmatpush.bf16.msra.mxu0 0
        %274 = vmatpush.bf16.msra.mxu0 0
        %275 = vmatpush.bf16.msra.mxu0 %v262
        %276 = vmatpush.bf16.msra.mxu0 %v261
        %277 = vmatmul.bf16.gmra.mxu0 %v267
        %v278 = vpop.f32.mrf.mxu0
        %v279 = vadd.f32 %v251, %v278
        %v280 = vpop.f32.mrf.mxu0
        %281 = vdwg.mxu0
        %282 = vst [vmem:[%s226] sm:$0xff] %v279
        %s283 = sand.u32 %s139, 1
        %s284 = scalar_lea.sflag [#allocation3], %s283
        %s285 = sand.u32 %s139, 1
        %s286 = smul.addr %s285, 8
        %s287 = scalar_lea.vmem [#allocation2], %s286
        // Predicated region
        $region37: #{forward.3} parent=35 // pred_check
          %p288 = pneg %p149
        $region38: #{forward.3} parent=35 // pred_check_branch
          %290 = sbr.rel (%p288) target = $region40
        $region39: #{forward.3} parent=35 // pred_region
          %292 = vsyncadd %s284, 0
          %s293 = sadd.s32 %s23, %s22
          %s294 = smul.addr %s293, 8
          %s295 = scalar_lea.hbm %s4, %s294
          %s297 = sshll.u32 %s287, 4
          %s298 = int_to_ptr.vmem [resolvable:$true] %s297
          %s299 = sshll.u32 %s295, 4
          %s300 = int_to_ptr.hbm [resolvable:$true] %s299
          %302 = dma.vmem_to_hbm [thread:$0]  %s298, 128, %s300, %s284
        $region40: #{forward.3} parent=35 // pred_fallthru
          _
      $region36: #{forward.3} parent=5 // pred_fallthru
        _
      %p303 = scmp.le.s32.totalorder 2, %s13
      // Predicated region
      $region41: #{forward.3} parent=5 // pred_check
        %p304 = pneg %p303
      $region42: #{forward.3} parent=5 // pred_check_branch
        %306 = sbr.rel (%p304) target = $region44
      $region43: #{forward.3} parent=5 // pred_region
        %s307 = ssub.s32 %s13, 2
        // Predicated region
        $region45: #{forward.3} parent=43 // pred_check
          %p308 = pneg %p155
        $region46: #{forward.3} parent=43 // pred_check_branch
          %310 = sbr.rel (%p308) target = $region48
        $region47: #{forward.3} parent=43 // pred_region
          %s311 = sand.u32 %s140, 1
          %s312 = scalar_lea.sflag [#allocation3], %s311
          %s313 = sand.u32 %s140, 1
          %s314 = smul.addr %s313, 8
          %s315 = scalar_lea.vmem [#allocation2], %s314
          %317 = dma.done %s312, 128
        $region48: #{forward.3} parent=43 // pred_fallthru
          _
      $region44: #{forward.3} parent=5 // pred_fallthru
        _
    $region6: #{forward.3} parent=1 // loop_footer
      %s17 = sadd.s32 1, %s13
    $region7: #{forward.3} parent=1 // loop_footer_branch
      %12 = sbr.rel target = $region3
    $region8: #{forward.3} parent=1 // loop_exit
      _
    %318 = vsyncpa [#allocation3], 1
    %s319 = scalar_lea.sflag [#allocation3], 1
    %320 = vsyncpa %s319, 1

// kernel: forward.2
$region0: #{forward.2}
  #allocation0 [shape = 'u32[]', space=smem, size = 0x4, offset = 0x4, fixed_abs, tag = 'smem constant byte address 0x4 - core index']
  #allocation1 [shape = 'u32[72,128]{1,0:T(1,128)}', space=vmem, size = 0x9000, scoped, tag = 'internal scratch']
  %s0 = inlined_call_operand.vmem [shape: bf16[8,16], index: 0, kind: input, shape index: {}]
  %s1 = inlined_call_operand.vmem [shape: bf16[16,32], index: 1, kind: input, shape index: {}]
  %s2 = inlined_call_operand.vmem [shape: bf16[8,32], index: 2, kind: output, shape index: {}]
  %s3 = sld [smem:[#allocation0]]
  $region18: #{forward.2} parent=0
    _
  %s5 = ssub.s32 1, %s3
  %s6 = scalar_select 0, %s5, %s3
  // Predicated region
  $region2: #{forward.2} parent=0 // pred_check
    _
  $region3: #{forward.2} parent=0 // pred_check_branch
    %8 = sbr.rel (0) target = $region5
  $region4: #{forward.2} parent=0 // pred_region
    _
  $region5: #{forward.2} parent=0 // pred_fallthru
    _
  // Predicated region
  $region6: #{forward.2} parent=0 // pred_check
    _
  $region7: #{forward.2} parent=0 // pred_check_branch
    %10 = sbr.rel (0) target = $region9
  $region8: #{forward.2} parent=0 // pred_region
    _
  $region9: #{forward.2} parent=0 // pred_fallthru
    _
  %v12 = vld [vmem:[%s0] sm:$0xf]
  %v13 = vld [vmem:[%s1] sm:$0xf]
  %v14 = vld [vmem:[%s1 + $0x4] sm:$0xf]
  %v17 = vunpack.c.l.b16 %v13
  %v18 = vunpack.c.l.b16 %v14
  %v19 = vpack.c.b16 %v18, %v17
  %vm21 = vcmask 130048
  %v23 = vsel %vm21, %v12, 0
  %25 = vmatpush.bf16.msra.mxu0 0
  %26 = vmatpush.bf16.msra.mxu0 0
  %27 = vmatpush.bf16.msra.mxu0 0
  %28 = vmatpush.bf16.msra.mxu0 0
  %29 = vmatpush.bf16.msra.mxu0 0
  %30 = vmatpush.bf16.msra.mxu0 0
  %31 = vmatpush.bf16.msra.mxu0 0
  %32 = vmatpush.bf16.msra.mxu0 %v19
  %33 = vmatmul.bf16.gmra.mxu0 %v23
  %v34 = vpop.f32.mrf.mxu0
  %v35 = vadd.f32 0.0, %v34
  %v36 = vpop.f32.mrf.mxu0
  %37 = vdwg.mxu0
  %vm38 = vcmask 261120
  %v39 = vsel %vm38, %v35, 0.0
  %40 = vadd.xlane.f32.xlu0 %v39
  %v41 = vpop.xlane.xlu0 %40
  %v42 = vrcp.pop 32.0
  %v43 = vmul.f32 32.0, %v42
  %v44 = vsub.f32 1.0, %v43
  %v45 = vmul.f32 %v42, %v44
  %v46 = vadd.f32 %v42, %v45
  %vm47 = vweird.f32 %v42
  %v48 = vsel %vm47, %v42, %v46
  %v49 = vmul.f32 %v41, %v48
  %v50 = vsub.f32 %v35, %v49
  %v51 = vmul.f32 %v50, %v50
  %v52 = vsel %vm38, %v51, 0.0
  %53 = vadd.xlane.f32.xlu0 %v52
  %v54 = vpop.xlane.xlu0 %53
  %v55 = vmul.f32 %v54, %v48
  %v56 = vadd.f32 %v55, 1e-05
  %v57 = vrsqrt.pop %v56
  %v58 = vmul.f32 %v57, %v56
  %v59 = vmul.f32 %v58, %v57
  %v60 = vmul.f32 0.5, %v59
  %v61 = vsub.f32 1.5, %v60
  %v62 = vmul.f32 %v57, %v61
  %vm63 = vweird.f32 %v56
  %vm64 = vweird.f32 %v57
  %vm65 = vmor %vm63, %vm64
  %v66 = vsel %vm65, %v57, %v62
  %v67 = vmul.f32 %v50, %v66
  %v68 = vpack.c.bf16 %v67, %v67
  %vm69 = vcmask 257024
  %70 = vst.msk [vmem:[%s2] sm:$0xf] %vm69, %v68
  // Predicated region
  $region10: #{forward.2} parent=0 // pred_check
    _
  $region11: #{forward.2} parent=0 // pred_check_branch
    %72 = sbr.rel (0) target = $region13
  $region12: #{forward.2} parent=0 // pred_region
    _
  $region13: #{forward.2} parent=0 // pred_fallthru
    _
  // Predicated region
  $region14: #{forward.2} parent=0 // pred_check
    _
  $region15: #{forward.2} parent=0 // pred_check_branch
    %74 = sbr.rel (0) target = $region17
  $region16: #{forward.2} parent=0 // pred_region
    _
  $region17: #{forward.2} parent=0 // pred_fallthru
    _

</llo_original>
